<compile_context>
chip_gen: v5e
topology: v5e:2x2
jax: 0.10.0
libtpu: 0.0.40
codegen_flags: <defaults>
</compile_context>

<pallas_src>
import functools

import jax
import jax.numpy as jnp
from jax import lax
from jax.experimental import pallas as pl
from jax.experimental.pallas import tpu as pltpu


def _round_up(x, m):
    return ((x + m - 1) // m) * m


def _round_down(x, m):
    return (x // m) * m


def _pick_tile(dim, align, t_max, waste_frac=0.15):
    """Largest align-multiple tile <= t_max with bounded padding waste."""
    dim_aligned = _round_up(dim, align)
    t = max(align, min(_round_up(t_max, align), dim_aligned))
    while t > align:
        padded = _round_up(dim, t)
        if padded == dim_aligned or (padded - dim) <= waste_frac * padded:
            return t
        t = max(align, _round_down(t // 2, align))
    return align


def _vmem_budget_bytes():
    """Generation-aware VMEM budget: ~60% of physical capacity, capped."""
    cap = 64 * 1024 * 1024  # conservative fallback (v7x per-TC VMEM)
    try:
        cap = int(pltpu.get_tpu_info().vmem_capacity_bytes)
    except Exception:
        pass
    return min(int(cap * 0.6), 96 * 1024 * 1024)


def fc_kernel(x_ref, w_ref, b_ref, o_ref, acc_ref, *, relu):
    """One (tm, tn) output tile, accumulating over the K grid axis.

    x_ref: (tm, tk)  activations
    w_ref: (tn, tk)  weight, native nn.Linear (out_features, in_features) layout
    b_ref: (1,  tn)  bias (f32)
    """
    k = pl.program_id(2)

    # x @ w.T on the MXU: contract last dims of both operands, f32 accumulate.
    partial = lax.dot_general(
        x_ref[...], w_ref[...],
        dimension_numbers=(((1,), (1,)), ((), ())),
        preferred_element_type=jnp.float32,
    )

    @pl.when(k == 0)
    def _():
        acc_ref[...] = partial                  # first K step: no zero-init + add

    @pl.when(k != 0)
    def _():
        acc_ref[...] = acc_ref[...] + partial

    # Epilogue: bias + ReLU + cast, only after the last K step.
    @pl.when(k == pl.num_programs(2) - 1)
    def _():
        y = acc_ref[...] + b_ref[...]           # (tm, tn) + (1, tn)
        if relu:
            y = jnp.maximum(y, 0.0)
        o_ref[...] = y.astype(o_ref.dtype)


def fc_forward(x, weight, bias, relu=True, *, compute_dtype=None,
               tm=512, tn=512, tk=1024):
    """FC.forward: y = relu(x @ weight.T + bias) (relu optional).

    x:      (batch, in_features)
    weight: (out_features, in_features)   -- native nn.Linear layout (no transpose)
    bias:   (out_features,)
    compute_dtype: optional lower precision (e.g. jnp.bfloat16) for the MXU
        operands; accumulation stays f32, output stays x.dtype.
    """
    batch, in_features = x.shape
    out_features, in_features_w = weight.shape
    assert in_features_w == in_features
    out_dtype = x.dtype

    # Optional low-precision compute path (MXU bf16 peak); accumulation stays f32.
    if compute_dtype is not None and jnp.dtype(compute_dtype) != x.dtype:
        x_c = x.astype(compute_dtype)
        w_c = weight.astype(compute_dtype)
    else:
        x_c, w_c = x, weight
    b_c = bias.astype(jnp.float32)              # bias added in the f32 epilogue

    in_isz = jnp.dtype(x_c.dtype).itemsize
    out_isz = jnp.dtype(out_dtype).itemsize
    sub = max(8, 32 // in_isz)                  # dtype-aware sublane multiple

    # Tile selection: large tiles, bounded padding waste, TPU alignment.
    tm = _pick_tile(batch, sub, tm)
    tn = _pick_tile(out_features, 128, tn)
    tk = _pick_tile(in_features, 128, tk)

    # Shrink tiles until the double-buffered working set fits the VMEM budget.
    budget = _vmem_budget_bytes()

    def footprint(tm_, tn_, tk_):
        return (2 * tm_ * tk_ * in_isz          # x: double-buffered input
                + 2 * tk_ * tn_ * in_isz        # w: double-buffered input
                + 2 * tm_ * tn_ * out_isz       # out: double-buffered output
                + tm_ * tn_ * 4                 # f32 accumulator scratch
                + 2 * tn_ * 4)                  # bias
    while footprint(tm, tn, tk) > 0.8 * budget:
        if tk >= tn and tk > 128:
            tk = max(128, _round_down(tk // 2, 128))
        elif tn > 128:
            tn = max(128, _round_down(tn // 2, 128))
        elif tm > sub:
            tm = max(sub, _round_down(tm // 2, sub))
        else:
            break

    M = _round_up(batch, tm)
    N = _round_up(out_features, tn)

    # v7x megacore: ensure >= 2 parallel (M, N) tiles when possible so both
    # TensorCores get work.
    if (M // tm) * (N // tn) < 2 and tn >= 256:
        tn = max(128, _round_down(tn // 2, 128))
        N = _round_up(out_features, tn)

    K = _round_up(in_features, tk)

    # Zero-pad only when needed (padded K contributes nothing; M/N sliced off).
    x_p = x_c if (M, K) == x_c.shape else jnp.pad(
        x_c, ((0, M - batch), (0, K - in_features)))
    w_p = w_c if (N, K) == w_c.shape else jnp.pad(
        w_c, ((0, N - out_features), (0, K - in_features)))
    b_p = (b_c if N == out_features
           else jnp.pad(b_c, (0, N - out_features))).reshape(1, N)

    grid = (M // tm, N // tn, K // tk)

    cost = pl.CostEstimate(
        flops=2 * M * N * K,
        transcendentals=0,
        bytes_accessed=in_isz * (M * K + N * K) + 4 * N + out_isz * M * N,
    )

    out_padded = pl.pallas_call(
        functools.partial(fc_kernel, relu=relu),
        out_shape=jax.ShapeDtypeStruct((M, N), out_dtype),
        grid_spec=pltpu.PrefetchScalarGridSpec(
            num_scalar_prefetch=0,
            grid=grid,
            in_specs=[
                pl.BlockSpec((tm, tk), lambda i, j, k: (i, k)),   # x tile
                pl.BlockSpec((tn, tk), lambda i, j, k: (j, k)),   # w tile (native)
                pl.BlockSpec((1, tn), lambda i, j, k: (0, j)),    # bias tile
            ],
            out_specs=pl.BlockSpec((tm, tn), lambda i, j, k: (i, j)),
            scratch_shapes=[pltpu.VMEM((tm, tn), jnp.float32)],
        ),
        compiler_params=pltpu.CompilerParams(
            dimension_semantics=("parallel", "parallel", "arbitrary"),
            vmem_limit_bytes=budget,
        ),
        cost_estimate=cost,
    )(x_p, w_p, b_p)

    if (M, N) != (batch, out_features):
        return out_padded[:batch, :out_features]
    return out_padded


if __name__ == "__main__":
    key = jax.random.PRNGKey(0)
    k_x, k_w, k_b, k_x2, k_w2, k_b2 = jax.random.split(key, 6)

    # --- Small FC, f32 path: y = relu(x @ W.T + b) ---
    batch, in_features, out_features = 8, 32, 64
    x = jax.random.normal(k_x, (batch, in_features), dtype=jnp.float32)
    bound = 1.0 / (in_features ** 0.5)   # mimic nn.Linear uniform init
    weight = jax.random.uniform(k_w, (out_features, in_features),
                                minval=-bound, maxval=bound, dtype=jnp.float32)
    bias = jax.random.uniform(k_b, (out_features,),
                              minval=-bound, maxval=bound, dtype=jnp.float32)

    out = jax.block_until_ready(fc_forward(x, weight, bias, relu=True))
    ref = jnp.maximum(x @ weight.T + bias, 0.0)
    assert out.shape == (batch, out_features)
    assert jnp.allclose(out, ref, atol=1e-5, rtol=1e-5)

    out_nr = jax.block_until_ready(fc_forward(x, weight, bias, relu=False))
    assert jnp.allclose(out_nr, x @ weight.T + bias, atol=1e-5, rtol=1e-5)

    # --- Multi-tile / multi-K-step exercise (forces the k>0 accumulate path) ---
    b2, i2, o2 = 16, 256, 256
    x2 = jax.random.normal(k_x2, (b2, i2), dtype=jnp.float32)
    bound2 = 1.0 / (i2 ** 0.5)
    w2 = jax.random.uniform(k_w2, (o2, i2), minval=-bound2, maxval=bound2,
                            dtype=jnp.float32)
    bias2 = jax.random.uniform(k_b2, (o2,), minval=-bound2, maxval=bound2,
                               dtype=jnp.float32)
    ref2 = jnp.maximum(
        lax.dot_general(x2, w2, (((1,), (1,)), ((), ())),
                        precision=lax.Precision.HIGHEST) + bias2, 0.0)
    out2 = jax.block_until_ready(fc_forward(x2, w2, bias2, relu=True, tk=128))
    assert jnp.allclose(out2, ref2, atol=1e-4, rtol=1e-4)

    # --- Optional bf16 compute path (f32 accumulation), loose tolerance ---
    out_bf16 = jax.block_until_ready(
        fc_forward(x2, w2, bias2, relu=True, compute_dtype=jnp.bfloat16))
    assert jnp.allclose(out_bf16, ref2, atol=1e-1, rtol=1e-1)

    print("KERNEL_OK")
</pallas_src>

<mosaic_0001>
module attributes {stable_mosaic.version = 11 : i64} {
  func.func @fc_kernel(%arg0: i32, %arg1: i32, %arg2: i32, %arg3: memref<8x128xf32, #tpu.memory_space<vmem>>, %arg4: memref<128x128xf32, #tpu.memory_space<vmem>>, %arg5: memref<1x128xf32, #tpu.memory_space<vmem>>, %arg6: memref<8x128xf32, #tpu.memory_space<vmem>>, %arg7: memref<8x128xf32, #tpu.memory_space<vmem>>) attributes {dimension_semantics = [#tpu.dimension_semantics<parallel>, #tpu.dimension_semantics<parallel>, #tpu.dimension_semantics<arbitrary>], iteration_bounds = array<i64: 1, 1, 1>, scalar_prefetch = 0 : i64, scratch_operands = 1 : i64, tpu.core_type = #tpu.core_type<tc>, window_params = [{transform_indices = @transform_0, window_bounds = array<i64: 8, 128>}, {transform_indices = @transform_1, window_bounds = array<i64: 128, 128>}, {transform_indices = @transform_2, window_bounds = array<i64: 1, 128>}, {transform_indices = @transform_3, window_bounds = array<i64: 8, 128>}]} {
    %c0 = arith.constant 0 : index
    %c0_0 = arith.constant 0 : index
    %0 = vector.load %arg3[%c0, %c0_0] : memref<8x128xf32, #tpu.memory_space<vmem>>, vector<8x128xf32>
    %c0_1 = arith.constant 0 : index
    %c0_2 = arith.constant 0 : index
    %1 = vector.load %arg4[%c0_1, %c0_2] : memref<128x128xf32, #tpu.memory_space<vmem>>, vector<128x128xf32>
    %cst = arith.constant dense<0.000000e+00> : vector<8x128xf32>
    %2 = tpu.matmul %0, %1, %cst {dimension_numbers = #tpu.dot_dimension_numbers<[1], [1], [0], [0], [0, 0, 1, 0], [], []>} : vector<8x128xf32>, vector<128x128xf32>, vector<8x128xf32> -> vector<8x128xf32>
    %c0_i32 = arith.constant 0 : i32
    %3 = arith.cmpi eq, %arg2, %c0_i32 : i32
    %4 = arith.extui %3 : i1 to i32
    %c0_i32_3 = arith.constant 0 : i32
    %5 = arith.cmpi ne, %4, %c0_i32_3 : i32
    scf.if %5 {
      %c0_8 = arith.constant 0 : index
      %c0_9 = arith.constant 0 : index
      %12 = vector.load %arg7[%c0_8, %c0_9] : memref<8x128xf32, #tpu.memory_space<vmem>>, vector<8x128xf32>
      tpu.vector_store %arg7[%c0_8, %c0_9], %2 {strides = array<i32>} : memref<8x128xf32, #tpu.memory_space<vmem>>, vector<8x128xf32>,
    } else {
    }
    %c0_i32_4 = arith.constant 0 : i32
    %6 = arith.cmpi ne, %arg2, %c0_i32_4 : i32
    %7 = arith.extui %6 : i1 to i32
    %c0_i32_5 = arith.constant 0 : i32
    %8 = arith.cmpi ne, %7, %c0_i32_5 : i32
    scf.if %8 {
      %c0_8 = arith.constant 0 : index
      %c0_9 = arith.constant 0 : index
      %12 = vector.load %arg7[%c0_8, %c0_9] : memref<8x128xf32, #tpu.memory_space<vmem>>, vector<8x128xf32>
      %13 = arith.addf %12, %2 : vector<8x128xf32>
      %c0_10 = arith.constant 0 : index
      %c0_11 = arith.constant 0 : index
      %14 = vector.load %arg7[%c0_10, %c0_11] : memref<8x128xf32, #tpu.memory_space<vmem>>, vector<8x128xf32>
      tpu.vector_store %arg7[%c0_10, %c0_11], %13 {strides = array<i32>} : memref<8x128xf32, #tpu.memory_space<vmem>>, vector<8x128xf32>,
    } else {
    }
    %c0_i32_6 = arith.constant 0 : i32
    %9 = arith.cmpi eq, %arg2, %c0_i32_6 : i32
    %10 = arith.extui %9 : i1 to i32
    %c0_i32_7 = arith.constant 0 : i32
    %11 = arith.cmpi ne, %10, %c0_i32_7 : i32
    scf.if %11 {
      %c0_8 = arith.constant 0 : index
      %c0_9 = arith.constant 0 : index
      %12 = vector.load %arg7[%c0_8, %c0_9] : memref<8x128xf32, #tpu.memory_space<vmem>>, vector<8x128xf32>
      %c0_10 = arith.constant 0 : index
      %c0_11 = arith.constant 0 : index
      %13 = vector.load %arg5[%c0_10, %c0_11] : memref<1x128xf32, #tpu.memory_space<vmem>>, vector<1x128xf32>
      %14 = vector.broadcast %13 : vector<1x128xf32> to vector<8x128xf32>
      %15 = arith.addf %12, %14 : vector<8x128xf32>
      %cst_12 = arith.constant 0.000000e+00 : f32
      %16 = vector.broadcast %cst_12 : f32 to vector<8x128xf32>
      %17 = arith.maximumf %15, %16 : vector<8x128xf32>
      %c0_13 = arith.constant 0 : index
      %c0_14 = arith.constant 0 : index
      %18 = vector.load %arg6[%c0_13, %c0_14] : memref<8x128xf32, #tpu.memory_space<vmem>>, vector<8x128xf32>
      tpu.vector_store %arg6[%c0_13, %c0_14], %17 {strides = array<i32>} : memref<8x128xf32, #tpu.memory_space<vmem>>, vector<8x128xf32>,
    } else {
    }
    return
  }
  func.func @transform_0(%arg0: i32, %arg1: i32, %arg2: i32) -> (i32, i32) {
    %c0_i32 = arith.constant 0 : i32
    return %arg0, %arg2 : i32, i32
  }
  func.func @transform_1(%arg0: i32, %arg1: i32, %arg2: i32) -> (i32, i32) {
    %c0_i32 = arith.constant 0 : i32
    return %arg1, %arg2 : i32, i32
  }
  func.func @transform_2(%arg0: i32, %arg1: i32, %arg2: i32) -> (i32, i32) {
    %c0_i32 = arith.constant 0 : i32
    %c0_i32_0 = arith.constant 0 : i32
    return %c0_i32, %arg1 : i32, i32
  }
  func.func @transform_3(%arg0: i32, %arg1: i32, %arg2: i32) -> (i32, i32) {
    %c0_i32 = arith.constant 0 : i32
    return %arg0, %arg1 : i32, i32
  }
}

</mosaic_0001>

<llo_original>
// kernel: tpu_custom_call.1
$region0: #{tpu_custom_call.1}
  #allocation0 [shape = 'u32[]', space=smem, size = 0x4, offset = 0x4, fixed_abs, tag = 'smem constant byte address 0x4 - core index']
  #allocation1 [shape = 'u32[72,128]{1,0:T(1,128)}', space=vmem, size = 0x9000, scoped, tag = 'internal scratch']
  #allocation2 [shape = 'f32[8,128]{1,0:T(8,128)}', space=vmem, size = 0x1000, scoped, tag = 'scratch operand']
  %s0 = inlined_call_operand.hbm [shape: f32[8,128], index: 0, kind: input, shape index: {}]
  %s1 = inlined_call_operand.hbm [shape: f32[128,128], index: 1, kind: input, shape index: {}]
  %s2 = inlined_call_operand.vmem [shape: f32[1,128], index: 2, kind: input, shape index: {}]
  %s3 = inlined_call_operand.hbm [shape: f32[8,128], index: 3, kind: output, shape index: {}]
  %s4 = sld [smem:[#allocation0]]
  $region42: #{tpu_custom_call.1} parent=0
    _
  %s6 = ssub.s32 1, %s4
  %s7 = scalar_select 0, %s6, %s4
  $region1: #{tpu_custom_call.1} parent=0
    #allocation3 [shape = 'u8[4096]{0}', space=vmem, size = 0x1000, scoped, tag = 'input window, operand 0, single buffered']
    #allocation4 [shape = 's32[1]{0}', space=sflag, size = 0x4, scoped, tag = 'scoped memory for tpu_custom_call.1']
    #allocation5 [shape = 's32[1]{0}', space=sflag, size = 0x4, scoped, tag = 'scoped memory for tpu_custom_call.1']
    #allocation6 [shape = 'u8[65536]{0}', space=vmem, size = 0x10000, scoped, tag = 'input window, operand 1, single buffered']
    #allocation7 [shape = 's32[1]{0}', space=sflag, size = 0x4, scoped, tag = 'scoped memory for tpu_custom_call.1']
    #allocation8 [shape = 'u8[4096]{0}', space=vmem, size = 0x1000, scoped, tag = 'output window, operand 0, single buffered']
    %8 = vsyncpa [#allocation4], 0
    %9 = vsyncpa [#allocation7], 0
    %10 = vsyncpa [#allocation5], 0
    // Predicated region
    $region2: #{tpu_custom_call.1} parent=1 // pred_check
      _
    $region3: #{tpu_custom_call.1} parent=1 // pred_check_branch
      %12 = sbr.rel (0) target = $region5
    $region4: #{tpu_custom_call.1} parent=1 // pred_region
      %14 = vsyncadd [#allocation4], 0
      %s16 = sshll.u32 %s0, 4
      %s17 = int_to_ptr.hbm [resolvable:$true] %s16
      %s18 = sshll.u32 [#allocation3], 4
      %s19 = int_to_ptr.vmem [resolvable:$true] %s18
      %21 = dma.hbm_to_vmem [thread:$0]  %s17, 128, %s19, [#allocation4]
    $region5: #{tpu_custom_call.1} parent=1 // pred_fallthru
      _
    // Predicated region
    $region6: #{tpu_custom_call.1} parent=1 // pred_check
      _
    $region7: #{tpu_custom_call.1} parent=1 // pred_check_branch
      %23 = sbr.rel (0) target = $region9
    $region8: #{tpu_custom_call.1} parent=1 // pred_region
      %25 = vsyncadd [#allocation7], 0
      %s26 = sshll.u32 %s1, 4
      %s27 = int_to_ptr.hbm [resolvable:$true] %s26
      %s28 = sshll.u32 [#allocation6], 4
      %s29 = int_to_ptr.vmem [resolvable:$true] %s28
      %34 = dma.hbm_to_vmem [thread:$0]  %s27, 2048, %s29, [#allocation7], 128, 128, 8
    $region9: #{tpu_custom_call.1} parent=1 // pred_fallthru
      _
    // Predicated region
    $region10: #{tpu_custom_call.1} parent=1 // pred_check
      _
    $region11: #{tpu_custom_call.1} parent=1 // pred_check_branch
      %36 = sbr.rel (0) target = $region13
    $region12: #{tpu_custom_call.1} parent=1 // pred_region
      _
    $region13: #{tpu_custom_call.1} parent=1 // pred_fallthru
      _
    // Predicated region
    $region14: #{tpu_custom_call.1} parent=1 // pred_check
      _
    $region15: #{tpu_custom_call.1} parent=1 // pred_check_branch
      %38 = sbr.rel (0) target = $region17
    $region16: #{tpu_custom_call.1} parent=1 // pred_region
      %40 = dma.done [#allocation4], 128
    $region17: #{tpu_custom_call.1} parent=1 // pred_fallthru
      _
    // Predicated region
    $region18: #{tpu_custom_call.1} parent=1 // pred_check
      _
    $region19: #{tpu_custom_call.1} parent=1 // pred_check_branch
      %42 = sbr.rel (0) target = $region21
    $region20: #{tpu_custom_call.1} parent=1 // pred_region
      %44 = dma.done [#allocation7], 2048
    $region21: #{tpu_custom_call.1} parent=1 // pred_fallthru
      _
    %v45 = vld [vmem:[#allocation3] sm:$0xff]
    %v46 = vld [vmem:[#allocation6] sm:$0xff]
    %v47 = vld [vmem:[#allocation6 + $0x8] sm:$0xff]
    %v48 = vld [vmem:[#allocation6 + $0x10] sm:$0xff]
    %v49 = vld [vmem:[#allocation6 + $0x18] sm:$0xff]
    %v50 = vld [vmem:[#allocation6 + $0x20] sm:$0xff]
    %v51 = vld [vmem:[#allocation6 + $0x28] sm:$0xff]
    %v52 = vld [vmem:[#allocation6 + $0x30] sm:$0xff]
    %v53 = vld [vmem:[#allocation6 + $0x38] sm:$0xff]
    %v54 = vld [vmem:[#allocation6 + $0x40] sm:$0xff]
    %v55 = vld [vmem:[#allocation6 + $0x48] sm:$0xff]
    %v56 = vld [vmem:[#allocation6 + $0x50] sm:$0xff]
    %v57 = vld [vmem:[#allocation6 + $0x58] sm:$0xff]
    %v58 = vld [vmem:[#allocation6 + $0x60] sm:$0xff]
    %v59 = vld [vmem:[#allocation6 + $0x68] sm:$0xff]
    %v60 = vld [vmem:[#allocation6 + $0x70] sm:$0xff]
    %v61 = vld [vmem:[#allocation6 + $0x78] sm:$0xff]
    %62 = vmatpush.xpose.msra.mxu0 %v61
    %63 = vmatpush.xpose.msra.mxu0 %v60
    %64 = vmatpush.xpose.msra.mxu0 %v59
    %65 = vmatpush.xpose.msra.mxu0 %v58
    %66 = vmatpush.xpose.msra.mxu0 %v57
    %67 = vmatpush.xpose.msra.mxu0 %v56
    %68 = vmatpush.xpose.msra.mxu0 %v55
    %69 = vmatpush.xpose.msra.mxu0 %v54
    %70 = vmatpush.xpose.msra.mxu0 %v53
    %71 = vmatpush.xpose.msra.mxu0 %v52
    %72 = vmatpush.xpose.msra.mxu0 %v51
    %73 = vmatpush.xpose.msra.mxu0 %v50
    %74 = vmatpush.xpose.msra.mxu0 %v49
    %75 = vmatpush.xpose.msra.mxu0 %v48
    %76 = vmatpush.xpose.msra.mxu0 %v47
    %77 = vmatpush.xpose.msra.mxu0 %v46
    %78 = vmatmul.f32.gmra.mxu0 %v45
    %v79 = vpop.f32.mrf.mxu0
    %v80 = vadd.f32 0.0, %v79
    %81 = vdwg.mxu0
    %p82 = scmp.eq.s32.totalorder 0, 0
    // Predicated region
    $region22: #{tpu_custom_call.1} parent=1 // pred_check
      %p83 = pneg %p82
    $region23: #{tpu_custom_call.1} parent=1 // pred_check_branch
      %85 = sbr.rel (%p83) target = $region25
    $region24: #{tpu_custom_call.1} parent=1 // pred_region
      %86 = vst [vmem:[#allocation2] sm:$0xff] %v80
    $region25: #{tpu_custom_call.1} parent=1 // pred_fallthru
      _
    %p87 = scmp.ne.s32.totalorder 0, 0
    // Predicated region
    $region26: #{tpu_custom_call.1} parent=1 // pred_check
      %p88 = pneg %p87
    $region27: #{tpu_custom_call.1} parent=1 // pred_check_branch
      %90 = sbr.rel (%p88) target = $region29
    $region28: #{tpu_custom_call.1} parent=1 // pred_region
      %v91 = vld [vmem:[#allocation2] sm:$0xff]
      %v92 = vadd.f32 %v91, %v80
      %93 = vst [vmem:[#allocation2] sm:$0xff] %v92
    $region29: #{tpu_custom_call.1} parent=1 // pred_fallthru
      _
    // Predicated region
    $region30: #{tpu_custom_call.1} parent=1 // pred_check
      %p94 = pneg %p82
    $region31: #{tpu_custom_call.1} parent=1 // pred_check_branch
      %96 = sbr.rel (%p94) target = $region33
    $region32: #{tpu_custom_call.1} parent=1 // pred_region
      %v97 = vld [vmem:[#allocation2] sm:$0xff]
      %v98 = vld [vmem:[%s2] sm:$0x1]
      %v100 = vperm.slane %v98, 0
      %v102 = vadd.f32 %v97, %v100
      %v103 = vmax.f32 %v102, 0.0
      %104 = vst [vmem:[#allocation8] sm:$0xff] %v103
    $region33: #{tpu_custom_call.1} parent=1 // pred_fallthru
      _
    // Predicated region
    $region34: #{tpu_custom_call.1} parent=1 // pred_check
      _
    $region35: #{tpu_custom_call.1} parent=1 // pred_check_branch
      %106 = sbr.rel (0) target = $region37
    $region36: #{tpu_custom_call.1} parent=1 // pred_region
      %108 = vsyncadd [#allocation5], 0
      %s110 = sshll.u32 [#allocation8], 4
      %s111 = int_to_ptr.vmem [resolvable:$true] %s110
      %s112 = sshll.u32 %s3, 4
      %s113 = int_to_ptr.hbm [resolvable:$true] %s112
      %115 = dma.vmem_to_hbm [thread:$0]  %s111, 128, %s113, [#allocation5]
    $region37: #{tpu_custom_call.1} parent=1 // pred_fallthru
      _
    // Predicated region
    $region38: #{tpu_custom_call.1} parent=1 // pred_check
      _
    $region39: #{tpu_custom_call.1} parent=1 // pred_check_branch
      %117 = sbr.rel (0) target = $region41
    $region40: #{tpu_custom_call.1} parent=1 // pred_region
      %119 = dma.done [#allocation5], 128
    $region41: #{tpu_custom_call.1} parent=1 // pred_fallthru
      _
    %120 = vsyncpa [#allocation4], 1
    %121 = vsyncpa [#allocation7], 1
    %122 = vsyncpa [#allocation5], 1

</llo_original>
